<compile_context>
chip_gen: v7x
topology: tpu7x:2x2x1
jax: 0.10.0
libtpu: 0.0.40
codegen_flags: <defaults>
</compile_context>

<pallas_src>
import functools

import jax
import jax.numpy as jnp
from jax.experimental import pallas as pl
from jax.experimental.pallas import tpu as pltpu


def camnet_kernel(x_ref, w_ref, o_ref):
    # x_ref : (N, C, HW)  activations, HW on lanes
    # w_ref : (C, K)      fc weight^T with the 1/(H*W) pooling scale folded in
    # o_ref : (N, K)      softmax probabilities, K on lanes
    x = x_ref[...]                                        # (N, C, HW)

    # Global average pool (scale already folded into w): lane-dim sum on XLU.
    pooled = jnp.sum(x, axis=-1)                          # (N, C)

    # Fully connected layer on the MXU, f32 accumulation.
    logits = jnp.dot(pooled, w_ref[...],
                     preferred_element_type=jnp.float32)  # (N, K)

    # Numerically-stable softmax over classes (lanes): max/sum on XLU, exp on EUP.
    m = jnp.max(logits, axis=-1, keepdims=True)           # (N, 1)
    e = jnp.exp(logits - m)                               # (N, K)
    s = jnp.sum(e, axis=-1, keepdims=True)                # (N, 1)
    o_ref[...] = (e / s).astype(o_ref.dtype)


@functools.partial(jax.jit, static_argnames=())
def camnet_forward(x_nchw, w):
    """x_nchw: (N, C, H, W) float32; w: (numclasses, latent_dim) float32
    (PyTorch nn.Linear weight convention).  Returns (N, numclasses) softmax."""
    N, C, H, W = x_nchw.shape
    K, C_w = w.shape
    assert C == C_w, "channel dim must equal latent_dim"
    HW = H * W

    # Free contiguous reshape (H, W are already the trailing dims).
    x_flat = x_nchw.reshape(N, C, HW).astype(jnp.float32)

    # Fold the mean's 1/(H*W) scale into the (transposed) weight: exact.
    w_t = (jnp.transpose(w, (1, 0)) * jnp.float32(1.0 / HW)).astype(jnp.float32)

    out = pl.pallas_call(
        camnet_kernel,
        out_shape=jax.ShapeDtypeStruct((N, K), jnp.float32),
        grid_spec=pltpu.PrefetchScalarGridSpec(
            num_scalar_prefetch=0,
            grid=(1,),
            in_specs=[
                pl.BlockSpec((N, C, HW), lambda i: (0, 0, 0)),
                pl.BlockSpec((C, K), lambda i: (0, 0)),
            ],
            out_specs=pl.BlockSpec((N, K), lambda i: (0, 0)),
        ),
        compiler_params=pltpu.CompilerParams(
            dimension_semantics=("arbitrary",),
            vmem_limit_bytes=64 << 20,
        ),
    )(x_flat, w_t)
    return out


def camnet_reference(x_nchw, w):
    """Pure-JAX reference matching the PyTorch module."""
    N, C, H, W = x_nchw.shape
    pooled = x_nchw.reshape(N, C, H * W).mean(-1)          # global average pool
    logits = pooled @ w.T                                  # Linear, no bias
    return jax.nn.softmax(logits, axis=1)


if __name__ == "__main__":
    # Small shapes consistent with the module: x is (batch, latent_dim, H, W).
    N, latent_dim, Hs, Ws = 2, 128, 16, 16
    numclasses = 256

    key = jax.random.PRNGKey(0)
    kx, kw = jax.random.split(key, 2)

    x = jax.random.normal(kx, (N, latent_dim, Hs, Ws), jnp.float32)
    # nn.Linear(latent_dim, numclasses, bias=False).weight : (numclasses, latent_dim)
    w = 0.05 * jax.random.normal(kw, (numclasses, latent_dim), jnp.float32)

    out = camnet_forward(x, w)
    out = jax.block_until_ready(out)

    ref = camnet_reference(x, w)
    assert out.shape == (N, numclasses)
    max_err = float(jnp.max(jnp.abs(out - ref)))
    assert jnp.allclose(out, ref, rtol=1e-5, atol=1e-5), f"max_err={max_err}"
    # Rows must sum to 1 (softmax).
    assert jnp.allclose(jnp.sum(out, axis=1), 1.0, atol=1e-5)

    print("KERNEL_OK")
</pallas_src>

<mosaic_0001>
module attributes {stable_mosaic.version = 11 : i64} {
  func.func @camnet_kernel(%arg0: i32, %arg1: memref<2x128x256xf32, #tpu.memory_space<vmem>>, %arg2: memref<128x256xf32, #tpu.memory_space<vmem>>, %arg3: memref<2x256xf32, #tpu.memory_space<vmem>>) attributes {dimension_semantics = [#tpu.dimension_semantics<arbitrary>], iteration_bounds = array<i64: 1>, scalar_prefetch = 0 : i64, scratch_operands = 0 : i64, tpu.core_type = #tpu.core_type<tc>, window_params = [{pipeline_mode = #tpu.pipeline_mode<synchronous>, transform_indices = @transform_0, window_bounds = array<i64: 2, 128, 256>}, {pipeline_mode = #tpu.pipeline_mode<synchronous>, transform_indices = @transform_1, window_bounds = array<i64: 128, 256>}, {pipeline_mode = #tpu.pipeline_mode<synchronous>, transform_indices = @transform_2, window_bounds = array<i64: 2, 256>}]} {
    %c0 = arith.constant 0 : index
    %c0_0 = arith.constant 0 : index
    %c0_1 = arith.constant 0 : index
    %0 = vector.load %arg1[%c0, %c0_0, %c0_1] : memref<2x128x256xf32, #tpu.memory_space<vmem>>, vector<2x128x256xf32>
    %cst = arith.constant dense<0.000000e+00> : vector<2x128xf32>
    %1 = vector.multi_reduction <add>, %0, %cst [2] : vector<2x128x256xf32> to vector<2x128xf32>
    %c0_2 = arith.constant 0 : index
    %c0_3 = arith.constant 0 : index
    %2 = vector.load %arg2[%c0_2, %c0_3] : memref<128x256xf32, #tpu.memory_space<vmem>>, vector<128x256xf32>
    %cst_4 = arith.constant dense<0.000000e+00> : vector<2x256xf32>
    %3 = tpu.matmul %1, %2, %cst_4 {dimension_numbers = #tpu.dot_dimension_numbers<[1], [0], [0], [1], [0, 0, 1, 1], [], []>} : vector<2x128xf32>, vector<128x256xf32>, vector<2x256xf32> -> vector<2x256xf32>
    %cst_5 = arith.constant dense<0xFF800000> : vector<2xf32>
    %4 = vector.multi_reduction <maximumf>, %3, %cst_5 [1] : vector<2x256xf32> to vector<2xf32>
    %5 = vector.shape_cast %4 : vector<2xf32> to vector<2x1xf32>
    %6 = vector.broadcast %5 : vector<2x1xf32> to vector<2x256xf32>
    %7 = arith.subf %3, %6 : vector<2x256xf32>
    %8 = math.exp %7 : vector<2x256xf32>
    %cst_6 = arith.constant dense<0.000000e+00> : vector<2xf32>
    %9 = vector.multi_reduction <add>, %8, %cst_6 [1] : vector<2x256xf32> to vector<2xf32>
    %10 = vector.shape_cast %9 : vector<2xf32> to vector<2x1xf32>
    %11 = vector.broadcast %10 : vector<2x1xf32> to vector<2x256xf32>
    %12 = arith.divf %8, %11 : vector<2x256xf32>
    %c0_7 = arith.constant 0 : index
    %c0_8 = arith.constant 0 : index
    %13 = vector.load %arg3[%c0_7, %c0_8] : memref<2x256xf32, #tpu.memory_space<vmem>>, vector<2x256xf32>
    tpu.vector_store %arg3[%c0_7, %c0_8], %12 {strides = array<i32>} : memref<2x256xf32, #tpu.memory_space<vmem>>, vector<2x256xf32>,
    return
  }
  func.func @transform_0(%arg0: i32) -> (i32, i32, i32) {
    %c0_i32 = arith.constant 0 : i32
    %c0_i32_0 = arith.constant 0 : i32
    %c0_i32_1 = arith.constant 0 : i32
    %c0_i32_2 = arith.constant 0 : i32
    return %c0_i32, %c0_i32_0, %c0_i32_1 : i32, i32, i32
  }
  func.func @transform_1(%arg0: i32) -> (i32, i32) {
    %c0_i32 = arith.constant 0 : i32
    %c0_i32_0 = arith.constant 0 : i32
    %c0_i32_1 = arith.constant 0 : i32
    return %c0_i32, %c0_i32_0 : i32, i32
  }
  func.func @transform_2(%arg0: i32) -> (i32, i32) {
    %c0_i32 = arith.constant 0 : i32
    %c0_i32_0 = arith.constant 0 : i32
    %c0_i32_1 = arith.constant 0 : i32
    return %c0_i32, %c0_i32_0 : i32, i32
  }
}

</mosaic_0001>

<llo_original>
// kernel: camnet_forward.1
$region0: #{camnet_forward.1}
  #allocation0 [shape = 'u32[]', space=smem, size = 0x4, offset = 0x4, fixed_abs, tag = 'smem constant byte address 0x4 - core index']
  #allocation1 [shape = 'u32[144,128]{1,0:T(1,128)}', space=vmem, size = 0x12000, scoped, tag = 'internal scratch']
  %s0 = inlined_call_operand.hbm [shape: f32[2,128,256], index: 0, kind: input, shape index: {}]
  %s1 = inlined_call_operand.hbm [shape: f32[128,256], index: 1, kind: input, shape index: {}]
  %s2 = inlined_call_operand.hbm [shape: f32[2,256], index: 2, kind: output, shape index: {}]
  %s3 = sld [smem:[#allocation0]]
  $region26: #{camnet_forward.1} parent=0
    _
  %s5 = ssub.s32 1, %s3
  %s6 = scalar_select 0, %s5, %s3
  $region1: #{camnet_forward.1} parent=0
    #allocation2 [shape = 'u8[262144]{0}', space=vmem, size = 0x40000, scoped, tag = 'input window, operand 0, single buffered']
    #allocation3 [shape = 's32[1]{0}', space=sflag, size = 0x4, scoped, tag = 'scoped memory for camnet_forward.1']
    #allocation4 [shape = 's32[1]{0}', space=sflag, size = 0x4, scoped, tag = 'scoped memory for camnet_forward.1']
    #allocation5 [shape = 'u8[131072]{0}', space=vmem, size = 0x20000, scoped, tag = 'input window, operand 1, single buffered']
    #allocation6 [shape = 's32[1]{0}', space=sflag, size = 0x4, scoped, tag = 'scoped memory for camnet_forward.1']
    #allocation7 [shape = 'u8[2048]{0}', space=vmem, size = 0x800, scoped, tag = 'output window, operand 0, single buffered']
    %7 = vsyncpa [#allocation3], 0
    %8 = vsyncpa [#allocation6], 0
    %9 = vsyncpa [#allocation4], 0
    // Predicated region
    $region2: #{camnet_forward.1} parent=1 // pred_check
      _
    $region3: #{camnet_forward.1} parent=1 // pred_check_branch
      %11 = sbr.rel (0) target = $region5
    $region4: #{camnet_forward.1} parent=1 // pred_region
      %s13 = ssub.s32 8192, 8192
      %14 = vsyncadd [#allocation3], %s13
      %s15 = sshll.u32 [#allocation2], 4
      %s16 = int_to_ptr.vmem [resolvable:$true] %s15
      %21 = dma.hbm_to_vmem [thread:$0]  %s0, 8192, %s16, [#allocation3], 256, 256, 16
    $region5: #{camnet_forward.1} parent=1 // pred_fallthru
      _
    // Predicated region
    $region6: #{camnet_forward.1} parent=1 // pred_check
      _
    $region7: #{camnet_forward.1} parent=1 // pred_check_branch
      %23 = sbr.rel (0) target = $region9
    $region8: #{camnet_forward.1} parent=1 // pred_region
      %s25 = ssub.s32 4096, 4096
      %26 = vsyncadd [#allocation6], %s25
      %s27 = sshll.u32 [#allocation5], 4
      %s28 = int_to_ptr.vmem [resolvable:$true] %s27
      %33 = dma.hbm_to_vmem [thread:$0]  %s1, 4096, %s28, [#allocation6], 256, 256, 16
    $region9: #{camnet_forward.1} parent=1 // pred_fallthru
      _
    // Predicated region
    $region10: #{camnet_forward.1} parent=1 // pred_check
      _
    $region11: #{camnet_forward.1} parent=1 // pred_check_branch
      %35 = sbr.rel (0) target = $region13
    $region12: #{camnet_forward.1} parent=1 // pred_region
      %36 = dma.done [#allocation3], 8192
    $region13: #{camnet_forward.1} parent=1 // pred_fallthru
      _
    // Predicated region
    $region14: #{camnet_forward.1} parent=1 // pred_check
      _
    $region15: #{camnet_forward.1} parent=1 // pred_check_branch
      %38 = sbr.rel (0) target = $region17
    $region16: #{camnet_forward.1} parent=1 // pred_region
      %39 = dma.done [#allocation6], 4096
    $region17: #{camnet_forward.1} parent=1 // pred_fallthru
      _
    %v40 = vld [vmem:[#allocation2] sm:$0xff]
    %v41 = vld [vmem:[#allocation2 + $0x8] sm:$0xff]
    %v42 = vld [vmem:[#allocation2 + $0x10] sm:$0xff]
    %v43 = vld [vmem:[#allocation2 + $0x18] sm:$0xff]
    %v44 = vld [vmem:[#allocation2 + $0x20] sm:$0xff]
    %v45 = vld [vmem:[#allocation2 + $0x28] sm:$0xff]
    %v46 = vld [vmem:[#allocation2 + $0x30] sm:$0xff]
    %v47 = vld [vmem:[#allocation2 + $0x38] sm:$0xff]
    %v48 = vld [vmem:[#allocation2 + $0x40] sm:$0xff]
    %v49 = vld [vmem:[#allocation2 + $0x48] sm:$0xff]
    %v50 = vld [vmem:[#allocation2 + $0x50] sm:$0xff]
    %v51 = vld [vmem:[#allocation2 + $0x58] sm:$0xff]
    %v52 = vld [vmem:[#allocation2 + $0x60] sm:$0xff]
    %v53 = vld [vmem:[#allocation2 + $0x68] sm:$0xff]
    %v54 = vld [vmem:[#allocation2 + $0x70] sm:$0xff]
    %v55 = vld [vmem:[#allocation2 + $0x78] sm:$0xff]
    %v56 = vld [vmem:[#allocation2 + $0x80] sm:$0xff]
    %v57 = vld [vmem:[#allocation2 + $0x88] sm:$0xff]
    %v58 = vld [vmem:[#allocation2 + $0x90] sm:$0xff]
    %v59 = vld [vmem:[#allocation2 + $0x98] sm:$0xff]
    %v60 = vld [vmem:[#allocation2 + $0xa0] sm:$0xff]
    %v61 = vld [vmem:[#allocation2 + $0xa8] sm:$0xff]
    %v62 = vld [vmem:[#allocation2 + $0xb0] sm:$0xff]
    %v63 = vld [vmem:[#allocation2 + $0xb8] sm:$0xff]
    %v64 = vld [vmem:[#allocation2 + $0xc0] sm:$0xff]
    %v65 = vld [vmem:[#allocation2 + $0xc8] sm:$0xff]
    %v66 = vld [vmem:[#allocation2 + $0xd0] sm:$0xff]
    %v67 = vld [vmem:[#allocation2 + $0xd8] sm:$0xff]
    %v68 = vld [vmem:[#allocation2 + $0xe0] sm:$0xff]
    %v69 = vld [vmem:[#allocation2 + $0xe8] sm:$0xff]
    %v70 = vld [vmem:[#allocation2 + $0xf0] sm:$0xff]
    %v71 = vld [vmem:[#allocation2 + $0xf8] sm:$0xff]
    %v72 = vld [vmem:[#allocation2 + $0x100] sm:$0xff]
    %v73 = vld [vmem:[#allocation2 + $0x108] sm:$0xff]
    %v74 = vld [vmem:[#allocation2 + $0x110] sm:$0xff]
    %v75 = vld [vmem:[#allocation2 + $0x118] sm:$0xff]
    %v76 = vld [vmem:[#allocation2 + $0x120] sm:$0xff]
    %v77 = vld [vmem:[#allocation2 + $0x128] sm:$0xff]
    %v78 = vld [vmem:[#allocation2 + $0x130] sm:$0xff]
    %v79 = vld [vmem:[#allocation2 + $0x138] sm:$0xff]
    %v80 = vld [vmem:[#allocation2 + $0x140] sm:$0xff]
    %v81 = vld [vmem:[#allocation2 + $0x148] sm:$0xff]
    %v82 = vld [vmem:[#allocation2 + $0x150] sm:$0xff]
    %v83 = vld [vmem:[#allocation2 + $0x158] sm:$0xff]
    %v84 = vld [vmem:[#allocation2 + $0x160] sm:$0xff]
    %v85 = vld [vmem:[#allocation2 + $0x168] sm:$0xff]
    %v86 = vld [vmem:[#allocation2 + $0x170] sm:$0xff]
    %v87 = vld [vmem:[#allocation2 + $0x178] sm:$0xff]
    %v88 = vld [vmem:[#allocation2 + $0x180] sm:$0xff]
    %v89 = vld [vmem:[#allocation2 + $0x188] sm:$0xff]
    %v90 = vld [vmem:[#allocation2 + $0x190] sm:$0xff]
    %v91 = vld [vmem:[#allocation2 + $0x198] sm:$0xff]
    %v92 = vld [vmem:[#allocation2 + $0x1a0] sm:$0xff]
    %v93 = vld [vmem:[#allocation2 + $0x1a8] sm:$0xff]
    %v94 = vld [vmem:[#allocation2 + $0x1b0] sm:$0xff]
    %v95 = vld [vmem:[#allocation2 + $0x1b8] sm:$0xff]
    %v96 = vld [vmem:[#allocation2 + $0x1c0] sm:$0xff]
    %v97 = vld [vmem:[#allocation2 + $0x1c8] sm:$0xff]
    %v98 = vld [vmem:[#allocation2 + $0x1d0] sm:$0xff]
    %v99 = vld [vmem:[#allocation2 + $0x1d8] sm:$0xff]
    %v100 = vld [vmem:[#allocation2 + $0x1e0] sm:$0xff]
    %v101 = vld [vmem:[#allocation2 + $0x1e8] sm:$0xff]
    %v102 = vld [vmem:[#allocation2 + $0x1f0] sm:$0xff]
    %v103 = vld [vmem:[#allocation2 + $0x1f8] sm:$0xff]
    %v104 = vadd.f32 %v40, %v41
    %105 = vadd.xlane.f32.xlu0 %v104
    %v106 = vpop.xlane.xlu0 %105
    %v107 = vadd.f32 %v42, %v43
    %108 = vadd.xlane.f32.xlu0 %v107
    %v109 = vpop.xlane.xlu0 %108
    %v110 = vadd.f32 %v44, %v45
    %111 = vadd.xlane.f32.xlu0 %v110
    %v112 = vpop.xlane.xlu0 %111
    %v113 = vadd.f32 %v46, %v47
    %114 = vadd.xlane.f32.xlu0 %v113
    %v115 = vpop.xlane.xlu0 %114
    %v116 = vadd.f32 %v48, %v49
    %117 = vadd.xlane.f32.xlu0 %v116
    %v118 = vpop.xlane.xlu0 %117
    %v119 = vadd.f32 %v50, %v51
    %120 = vadd.xlane.f32.xlu0 %v119
    %v121 = vpop.xlane.xlu0 %120
    %v122 = vadd.f32 %v52, %v53
    %123 = vadd.xlane.f32.xlu0 %v122
    %v124 = vpop.xlane.xlu0 %123
    %v125 = vadd.f32 %v54, %v55
    %126 = vadd.xlane.f32.xlu0 %v125
    %v127 = vpop.xlane.xlu0 %126
    %v128 = vadd.f32 %v56, %v57
    %129 = vadd.xlane.f32.xlu0 %v128
    %v130 = vpop.xlane.xlu0 %129
    %v131 = vadd.f32 %v58, %v59
    %132 = vadd.xlane.f32.xlu0 %v131
    %v133 = vpop.xlane.xlu0 %132
    %v134 = vadd.f32 %v60, %v61
    %135 = vadd.xlane.f32.xlu0 %v134
    %v136 = vpop.xlane.xlu0 %135
    %v137 = vadd.f32 %v62, %v63
    %138 = vadd.xlane.f32.xlu0 %v137
    %v139 = vpop.xlane.xlu0 %138
    %v140 = vadd.f32 %v64, %v65
    %141 = vadd.xlane.f32.xlu0 %v140
    %v142 = vpop.xlane.xlu0 %141
    %v143 = vadd.f32 %v66, %v67
    %144 = vadd.xlane.f32.xlu0 %v143
    %v145 = vpop.xlane.xlu0 %144
    %v146 = vadd.f32 %v68, %v69
    %147 = vadd.xlane.f32.xlu0 %v146
    %v148 = vpop.xlane.xlu0 %147
    %v149 = vadd.f32 %v70, %v71
    %150 = vadd.xlane.f32.xlu0 %v149
    %v151 = vpop.xlane.xlu0 %150
    %v152 = vadd.f32 %v72, %v73
    %153 = vadd.xlane.f32.xlu0 %v152
    %v154 = vpop.xlane.xlu0 %153
    %v155 = vadd.f32 %v74, %v75
    %156 = vadd.xlane.f32.xlu0 %v155
    %v157 = vpop.xlane.xlu0 %156
    %v158 = vadd.f32 %v76, %v77
    %159 = vadd.xlane.f32.xlu0 %v158
    %v160 = vpop.xlane.xlu0 %159
    %v161 = vadd.f32 %v78, %v79
    %162 = vadd.xlane.f32.xlu0 %v161
    %v163 = vpop.xlane.xlu0 %162
    %v164 = vadd.f32 %v80, %v81
    %165 = vadd.xlane.f32.xlu0 %v164
    %v166 = vpop.xlane.xlu0 %165
    %v167 = vadd.f32 %v82, %v83
    %168 = vadd.xlane.f32.xlu0 %v167
    %v169 = vpop.xlane.xlu0 %168
    %v170 = vadd.f32 %v84, %v85
    %171 = vadd.xlane.f32.xlu0 %v170
    %v172 = vpop.xlane.xlu0 %171
    %v173 = vadd.f32 %v86, %v87
    %174 = vadd.xlane.f32.xlu0 %v173
    %v175 = vpop.xlane.xlu0 %174
    %v176 = vadd.f32 %v88, %v89
    %177 = vadd.xlane.f32.xlu0 %v176
    %v178 = vpop.xlane.xlu0 %177
    %v179 = vadd.f32 %v90, %v91
    %180 = vadd.xlane.f32.xlu0 %v179
    %v181 = vpop.xlane.xlu0 %180
    %v182 = vadd.f32 %v92, %v93
    %183 = vadd.xlane.f32.xlu0 %v182
    %v184 = vpop.xlane.xlu0 %183
    %v185 = vadd.f32 %v94, %v95
    %186 = vadd.xlane.f32.xlu0 %v185
    %v187 = vpop.xlane.xlu0 %186
    %v188 = vadd.f32 %v96, %v97
    %189 = vadd.xlane.f32.xlu0 %v188
    %v190 = vpop.xlane.xlu0 %189
    %v191 = vadd.f32 %v98, %v99
    %192 = vadd.xlane.f32.xlu0 %v191
    %v193 = vpop.xlane.xlu0 %192
    %v194 = vadd.f32 %v100, %v101
    %195 = vadd.xlane.f32.xlu0 %v194
    %v196 = vpop.xlane.xlu0 %195
    %v197 = vadd.f32 %v102, %v103
    %198 = vadd.xlane.f32.xlu0 %v197
    %v199 = vpop.xlane.xlu0 %198
    %v200 = vld [vmem:[#allocation5] sm:$0xff]
    %v201 = vld [vmem:[#allocation5 + $0x8] sm:$0xff]
    %v202 = vld [vmem:[#allocation5 + $0x10] sm:$0xff]
    %v203 = vld [vmem:[#allocation5 + $0x18] sm:$0xff]
    %v204 = vld [vmem:[#allocation5 + $0x20] sm:$0xff]
    %v205 = vld [vmem:[#allocation5 + $0x28] sm:$0xff]
    %v206 = vld [vmem:[#allocation5 + $0x30] sm:$0xff]
    %v207 = vld [vmem:[#allocation5 + $0x38] sm:$0xff]
    %v208 = vld [vmem:[#allocation5 + $0x40] sm:$0xff]
    %v209 = vld [vmem:[#allocation5 + $0x48] sm:$0xff]
    %v210 = vld [vmem:[#allocation5 + $0x50] sm:$0xff]
    %v211 = vld [vmem:[#allocation5 + $0x58] sm:$0xff]
    %v212 = vld [vmem:[#allocation5 + $0x60] sm:$0xff]
    %v213 = vld [vmem:[#allocation5 + $0x68] sm:$0xff]
    %v214 = vld [vmem:[#allocation5 + $0x70] sm:$0xff]
    %v215 = vld [vmem:[#allocation5 + $0x78] sm:$0xff]
    %v216 = vld [vmem:[#allocation5 + $0x80] sm:$0xff]
    %v217 = vld [vmem:[#allocation5 + $0x88] sm:$0xff]
    %v218 = vld [vmem:[#allocation5 + $0x90] sm:$0xff]
    %v219 = vld [vmem:[#allocation5 + $0x98] sm:$0xff]
    %v220 = vld [vmem:[#allocation5 + $0xa0] sm:$0xff]
    %v221 = vld [vmem:[#allocation5 + $0xa8] sm:$0xff]
    %v222 = vld [vmem:[#allocation5 + $0xb0] sm:$0xff]
    %v223 = vld [vmem:[#allocation5 + $0xb8] sm:$0xff]
    %v224 = vld [vmem:[#allocation5 + $0xc0] sm:$0xff]
    %v225 = vld [vmem:[#allocation5 + $0xc8] sm:$0xff]
    %v226 = vld [vmem:[#allocation5 + $0xd0] sm:$0xff]
    %v227 = vld [vmem:[#allocation5 + $0xd8] sm:$0xff]
    %v228 = vld [vmem:[#allocation5 + $0xe0] sm:$0xff]
    %v229 = vld [vmem:[#allocation5 + $0xe8] sm:$0xff]
    %v230 = vld [vmem:[#allocation5 + $0xf0] sm:$0xff]
    %v231 = vld [vmem:[#allocation5 + $0xf8] sm:$0xff]
    %v264 = vlaneseq
    %v265 = vand.u32 %v264, 127
    %v266 = vlaneseq
    %v267 = vshrl.u32 %v266, 7
    %v268 = vsub.s32 %v265, %v267
    %v269 = vrot.slane %v106, %v268
    %v270 = vadd.s32 %v265, 4294967288
    %v271 = vlaneseq
    %v272 = vshrl.u32 %v271, 7
    %v273 = vsub.s32 %v270, %v272
    %v274 = vrot.slane %v109, %v273
    %vm275 = vcmask 130112
    %v276 = vsel %vm275, %v274, %v269
    %v277 = vadd.s32 %v265, 4294967280
    %v278 = vlaneseq
    %v279 = vshrl.u32 %v278, 7
    %v280 = vsub.s32 %v277, %v279
    %v281 = vrot.slane %v112, %v280
    %vm282 = vcmask 195712
    %v283 = vsel %vm282, %v281, %v276
    %v284 = vadd.s32 %v265, 4294967272
    %v285 = vlaneseq
    %v286 = vshrl.u32 %v285, 7
    %v287 = vsub.s32 %v284, %v286
    %v288 = vrot.slane %v115, %v287
    %vm289 = vcmask 261312
    %v290 = vsel %vm289, %v288, %v283
    %v291 = vadd.s32 %v265, 4294967264
    %v292 = vlaneseq
    %v293 = vshrl.u32 %v292, 7
    %v294 = vsub.s32 %v291, %v293
    %v295 = vrot.slane %v118, %v294
    %vm296 = vcmask 326912
    %v297 = vsel %vm296, %v295, %v290
    %v298 = vadd.s32 %v265, 4294967256
    %v299 = vlaneseq
    %v300 = vshrl.u32 %v299, 7
    %v301 = vsub.s32 %v298, %v300
    %v302 = vrot.slane %v121, %v301
    %vm303 = vcmask 392512
    %v304 = vsel %vm303, %v302, %v297
    %v305 = vadd.s32 %v265, 4294967248
    %v306 = vlaneseq
    %v307 = vshrl.u32 %v306, 7
    %v308 = vsub.s32 %v305, %v307
    %v309 = vrot.slane %v124, %v308
    %vm310 = vcmask 458112
    %v311 = vsel %vm310, %v309, %v304
    %v312 = vadd.s32 %v265, 4294967240
    %v313 = vlaneseq
    %v314 = vshrl.u32 %v313, 7
    %v315 = vsub.s32 %v312, %v314
    %v316 = vrot.slane %v127, %v315
    %vm317 = vcmask 523712
    %v318 = vsel %vm317, %v316, %v311
    %v319 = vadd.s32 %v265, 4294967232
    %v320 = vlaneseq
    %v321 = vshrl.u32 %v320, 7
    %v322 = vsub.s32 %v319, %v321
    %v323 = vrot.slane %v130, %v322
    %vm324 = vcmask 589312
    %v325 = vsel %vm324, %v323, %v318
    %v326 = vadd.s32 %v265, 4294967224
    %v327 = vlaneseq
    %v328 = vshrl.u32 %v327, 7
    %v329 = vsub.s32 %v326, %v328
    %v330 = vrot.slane %v133, %v329
    %vm331 = vcmask 654912
    %v332 = vsel %vm331, %v330, %v325
    %v333 = vadd.s32 %v265, 4294967216
    %v334 = vlaneseq
    %v335 = vshrl.u32 %v334, 7
    %v336 = vsub.s32 %v333, %v335
    %v337 = vrot.slane %v136, %v336
    %vm338 = vcmask 720512
    %v339 = vsel %vm338, %v337, %v332
    %v340 = vadd.s32 %v265, 4294967208
    %v341 = vlaneseq
    %v342 = vshrl.u32 %v341, 7
    %v343 = vsub.s32 %v340, %v342
    %v344 = vrot.slane %v139, %v343
    %vm345 = vcmask 786112
    %v346 = vsel %vm345, %v344, %v339
    %v347 = vadd.s32 %v265, 4294967200
    %v348 = vlaneseq
    %v349 = vshrl.u32 %v348, 7
    %v350 = vsub.s32 %v347, %v349
    %v351 = vrot.slane %v142, %v350
    %vm352 = vcmask 851712
    %v353 = vsel %vm352, %v351, %v346
    %v354 = vadd.s32 %v265, 4294967192
    %v355 = vlaneseq
    %v356 = vshrl.u32 %v355, 7
    %v357 = vsub.s32 %v354, %v356
    %v358 = vrot.slane %v145, %v357
    %vm359 = vcmask 917312
    %v360 = vsel %vm359, %v358, %v353
    %v361 = vadd.s32 %v265, 4294967184
    %v362 = vlaneseq
    %v363 = vshrl.u32 %v362, 7
    %v364 = vsub.s32 %v361, %v363
    %v365 = vrot.slane %v148, %v364
    %vm366 = vcmask 982912
    %v367 = vsel %vm366, %v365, %v360
    %v368 = vadd.s32 %v265, 4294967176
    %v369 = vlaneseq
    %v370 = vshrl.u32 %v369, 7
    %v371 = vsub.s32 %v368, %v370
    %v372 = vrot.slane %v151, %v371
    %vm373 = vcmask 1048512
    %v374 = vsel %vm373, %v372, %v367
    %v375 = vlaneseq
    %v376 = vshrl.u32 %v375, 7
    %v377 = vsub.s32 %v265, %v376
    %v378 = vrot.slane %v154, %v377
    %v379 = vlaneseq
    %v380 = vshrl.u32 %v379, 7
    %v381 = vsub.s32 %v270, %v380
    %v382 = vrot.slane %v157, %v381
    %v383 = vsel %vm275, %v382, %v378
    %v384 = vlaneseq
    %v385 = vshrl.u32 %v384, 7
    %v386 = vsub.s32 %v277, %v385
    %v387 = vrot.slane %v160, %v386
    %v388 = vsel %vm282, %v387, %v383
    %v389 = vlaneseq
    %v390 = vshrl.u32 %v389, 7
    %v391 = vsub.s32 %v284, %v390
    %v392 = vrot.slane %v163, %v391
    %v393 = vsel %vm289, %v392, %v388
    %v394 = vlaneseq
    %v395 = vshrl.u32 %v394, 7
    %v396 = vsub.s32 %v291, %v395
    %v397 = vrot.slane %v166, %v396
    %v398 = vsel %vm296, %v397, %v393
    %v399 = vlaneseq
    %v400 = vshrl.u32 %v399, 7
    %v401 = vsub.s32 %v298, %v400
    %v402 = vrot.slane %v169, %v401
    %v403 = vsel %vm303, %v402, %v398
    %v404 = vlaneseq
    %v405 = vshrl.u32 %v404, 7
    %v406 = vsub.s32 %v305, %v405
    %v407 = vrot.slane %v172, %v406
    %v408 = vsel %vm310, %v407, %v403
    %v409 = vlaneseq
    %v410 = vshrl.u32 %v409, 7
    %v411 = vsub.s32 %v312, %v410
    %v412 = vrot.slane %v175, %v411
    %v413 = vsel %vm317, %v412, %v408
    %v414 = vlaneseq
    %v415 = vshrl.u32 %v414, 7
    %v416 = vsub.s32 %v319, %v415
    %v417 = vrot.slane %v178, %v416
    %v418 = vsel %vm324, %v417, %v413
    %v419 = vlaneseq
    %v420 = vshrl.u32 %v419, 7
    %v421 = vsub.s32 %v326, %v420
    %v422 = vrot.slane %v181, %v421
    %v423 = vsel %vm331, %v422, %v418
    %v424 = vlaneseq
    %v425 = vshrl.u32 %v424, 7
    %v426 = vsub.s32 %v333, %v425
    %v427 = vrot.slane %v184, %v426
    %v428 = vsel %vm338, %v427, %v423
    %v429 = vlaneseq
    %v430 = vshrl.u32 %v429, 7
    %v431 = vsub.s32 %v340, %v430
    %v432 = vrot.slane %v187, %v431
    %v433 = vsel %vm345, %v432, %v428
    %v434 = vlaneseq
    %v435 = vshrl.u32 %v434, 7
    %v436 = vsub.s32 %v347, %v435
    %v437 = vrot.slane %v190, %v436
    %v438 = vsel %vm352, %v437, %v433
    %v439 = vlaneseq
    %v440 = vshrl.u32 %v439, 7
    %v441 = vsub.s32 %v354, %v440
    %v442 = vrot.slane %v193, %v441
    %v443 = vsel %vm359, %v442, %v438
    %v444 = vlaneseq
    %v445 = vshrl.u32 %v444, 7
    %v446 = vsub.s32 %v361, %v445
    %v447 = vrot.slane %v196, %v446
    %v448 = vsel %vm366, %v447, %v443
    %v449 = vlaneseq
    %v450 = vshrl.u32 %v449, 7
    %v451 = vsub.s32 %v368, %v450
    %v452 = vrot.slane %v199, %v451
    %v453 = vsel %vm373, %v452, %v448
    %vm454 = vcmask 1041409
    %v455 = vsel %vm454, %v453, %v374
    %457 = vmatprep.subr.mxu0 %v201
    %458 = vmatpush1.msra.mxu0 %v200
    %459 = vmatprep.subr.mxu0 %v203
    %460 = vmatpush1.msra.mxu0 %v202
    %461 = vmatprep.subr.mxu0 %v205
    %462 = vmatpush1.msra.mxu0 %v204
    %463 = vmatprep.subr.mxu0 %v207
    %464 = vmatpush1.msra.mxu0 %v206
    %465 = vmatprep.subr.mxu0 %v209
    %466 = vmatpush1.msra.mxu0 %v208
    %467 = vmatprep.subr.mxu0 %v211
    %468 = vmatpush1.msra.mxu0 %v210
    %469 = vmatprep.subr.mxu0 %v213
    %470 = vmatpush1.msra.mxu0 %v212
    %471 = vmatprep.subr.mxu0 %v215
    %472 = vmatpush1.msra.mxu0 %v214
    %473 = vmatprep.subr.mxu0 %v217
    %474 = vmatpush1.msra.mxu0 %v216
    %475 = vmatprep.subr.mxu0 %v219
    %476 = vmatpush1.msra.mxu0 %v218
    %477 = vmatprep.subr.mxu0 %v221
    %478 = vmatpush1.msra.mxu0 %v220
    %479 = vmatprep.subr.mxu0 %v223
    %480 = vmatpush1.msra.mxu0 %v222
    %481 = vmatprep.subr.mxu0 %v225
    %482 = vmatpush1.msra.mxu0 %v224
    %483 = vmatprep.subr.mxu0 %v227
    %484 = vmatpush1.msra.mxu0 %v226
    %485 = vmatprep.subr.mxu0 %v229
    %486 = vmatpush1.msra.mxu0 %v228
    %487 = vmatprep.subr.mxu0 %v231
    %488 = vmatpush1.msra.mxu0 %v230
    %489 = vmatprep.subr.mxu0 0.0
    %490 = vmatpush1.msra.mxu0 0.0
    %491 = vmatprep.subr.mxu0 0.0
    %492 = vmatpush1.msra.mxu0 0.0
    %493 = vmatprep.subr.mxu0 0.0
    %494 = vmatpush1.msra.mxu0 0.0
    %495 = vmatprep.subr.mxu0 0.0
    %496 = vmatpush1.msra.mxu0 0.0
    %497 = vmatprep.subr.mxu0 0.0
    %498 = vmatpush1.msra.mxu0 0.0
    %499 = vmatprep.subr.mxu0 0.0
    %500 = vmatpush1.msra.mxu0 0.0
    %501 = vmatprep.subr.mxu0 0.0
    %502 = vmatpush1.msra.mxu0 0.0
    %503 = vmatprep.subr.mxu0 0.0
    %504 = vmatpush1.msra.mxu0 0.0
    %505 = vmatprep.subr.mxu0 0.0
    %506 = vmatpush1.msra.mxu0 0.0
    %507 = vmatprep.subr.mxu0 0.0
    %508 = vmatpush1.msra.mxu0 0.0
    %509 = vmatprep.subr.mxu0 0.0
    %510 = vmatpush1.msra.mxu0 0.0
    %511 = vmatprep.subr.mxu0 0.0
    %512 = vmatpush1.msra.mxu0 0.0
    %513 = vmatprep.subr.mxu0 0.0
    %514 = vmatpush1.msra.mxu0 0.0
    %515 = vmatprep.subr.mxu0 0.0
    %516 = vmatpush1.msra.mxu0 0.0
    %517 = vmatprep.subr.mxu0 0.0
    %518 = vmatpush1.msra.mxu0 0.0
    %519 = vmatprep.subr.mxu0 0.0
    %520 = vmatpush1.msra.mxu0 0.0
    %521 = vmatprep.mubr.f32.mxu0 0.0
    %522 = vmatmul.mubr.f32.gmra.mrb[0].mxu0 %v455
    %v523 = vpop.f32.mrb[0].mxu0
    %v524 = vadd.f32 0.0, %v523
    %v525 = vpop.f32.mrb[0].mxu0
    %v526 = vadd.f32 0.0, %v525
    %527 = vdwg.mxu0
    %vm528 = vcmask 1041408
    %v529 = vsel %vm528, %v524, -inf
    %v530 = vsel %vm528, %v526, -inf
    %v531 = vmax.f32 %v529, %v530
    %532 = vmax.xlane.f32.xlu0 %v531
    %v533 = vpop.xlane.xlu0 %532
    %v534 = vsub.f32 %v524, %v533
    %v535 = vsub.f32 %v526, %v533
    %v536 = vmul.f32 %v534, 1.442695
    %v537 = vpow.pop %v536
    %v538 = vmul.f32 %v535, 1.442695
    %v539 = vpow.pop %v538
    %v540 = vsel %vm528, %v537, 0.0
    %v541 = vsel %vm528, %v539, 0.0
    %v542 = vadd.f32 %v540, %v541
    %543 = vadd.xlane.f32.xlu0 %v542
    %v544 = vpop.xlane.xlu0 %543
    %v545 = vrcp.pop %v544
    %v546 = vmul.f32 %v537, %v545
    %v547 = vmul.f32 %v539, %v545
    %v550 = vcombine.low %v546, %v547
    %v552 = vunpack.c.l.s4 1983009808
    %v553 = vunpack.c.0.s8 %v552
    %v554 = vlaneseq
    %v555 = vshrl.u32 %v554, 7
    %v556 = vsub.s32 %v553, %v555
    %v557 = vrot.slane %v550, %v556
    %559 = vst [vmem:[#allocation7] sm:$0xf] %v557
    // Predicated region
    $region18: #{camnet_forward.1} parent=1 // pred_check
      _
    $region19: #{camnet_forward.1} parent=1 // pred_check_branch
      %561 = sbr.rel (0) target = $region21
    $region20: #{camnet_forward.1} parent=1 // pred_region
      %s563 = ssub.s32 64, 64
      %564 = vsyncadd [#allocation4], %s563
      %s566 = sshll.u32 [#allocation7], 4
      %s567 = int_to_ptr.vmem [resolvable:$true] %s566
      %569 = dma.vmem_to_hbm [thread:$0]  %s567, 64, %s2, [#allocation4]
    $region21: #{camnet_forward.1} parent=1 // pred_fallthru
      _
    // Predicated region
    $region22: #{camnet_forward.1} parent=1 // pred_check
      _
    $region23: #{camnet_forward.1} parent=1 // pred_check_branch
      %571 = sbr.rel (0) target = $region25
    $region24: #{camnet_forward.1} parent=1 // pred_region
      %572 = dma.done [#allocation4], 64
    $region25: #{camnet_forward.1} parent=1 // pred_fallthru
      _
    %573 = vsyncpa [#allocation3], 1
    %574 = vsyncpa [#allocation6], 1
    %575 = vsyncpa [#allocation4], 1

</llo_original>
